<compile_context>
chip_gen: v6e
topology: v6e:2x2x1
jax: 0.10.0
libtpu: 0.0.40
codegen_flags: <defaults>
</compile_context>

<pallas_src>
import functools

import jax
import jax.numpy as jnp
from jax.experimental import pallas as pl
from jax.experimental.pallas import tpu as pltpu


_INPUT_VMEM_BUDGET = 24 * 1024 * 1024   # 2 inputs x 2 pipeline buffers
_VMEM_LIMIT_BYTES = 48 * 1024 * 1024    # explicit scoped-VMEM limit (<= v7x 64 MiB)


def _round_up(x, m):
    return ((x + m - 1) // m) * m


def _distill_kl_kernel(ys_ref, yt_ref, partial_ref, *, inv_temperature, batch,
                       tile_b, mask_rows):
    """Per-tile un-normalized KL(p_t || p_s) contribution (f32 accumulation)."""
    inv_T = jnp.float32(inv_temperature)
    ys = ys_ref[...].astype(jnp.float32) * inv_T
    yt = yt_ref[...].astype(jnp.float32) * inv_T

    if mask_rows:
        # Ragged last tile: zero the invalid rows BEFORE any math.  Zeroed
        # logits give uniform-vs-uniform softmaxes -> exactly 0 KL, and no
        # NaN/inf from unspecified out-of-bounds block contents can leak in.
        row0 = pl.program_id(0) * tile_b
        rows = row0 + jax.lax.broadcasted_iota(jnp.int32, (tile_b, 1), 0)
        valid = rows < batch
        ys = jnp.where(valid, ys, jnp.float32(0.0))
        yt = jnp.where(valid, yt, jnp.float32(0.0))

    # Student: only log Z_s is needed; log_softmax is never materialized.
    ys_shift = ys - jnp.max(ys, axis=-1, keepdims=True)
    log_z_s = jnp.log(jnp.sum(jnp.exp(ys_shift), axis=-1, keepdims=True))

    # Teacher: softmax via a single exp + exact per-row reciprocal (cheap).
    yt_shift = yt - jnp.max(yt, axis=-1, keepdims=True)
    e_t = jnp.exp(yt_shift)
    z_t = jnp.sum(e_t, axis=-1, keepdims=True)
    p_t = e_t * (jnp.float32(1.0) / z_t)

    # sum_c p_t * (log p_t - log p_s)
    #   = sum_c p_t * (yt_shift - ys_shift) + (log Z_s - log Z_t)
    # (uses sum_c p_t == 1 per row).
    per_row = (jnp.sum(p_t * (yt_shift - ys_shift), axis=-1, keepdims=True)
               + (log_z_s - jnp.log(z_t)))
    partial = jnp.sum(per_row)

    # Lane-dense (8, 128) store; the wrapper reads element [0, 0] of each slab.
    partial_ref[...] = jnp.full(partial_ref.shape, partial, dtype=jnp.float32)


def _pick_tile_b(batch, num_classes, itemsize):
    """Tile rows from the VMEM budget; >= 2 tiles when the batch allows it."""
    bytes_per_row = 4 * num_classes * itemsize  # 2 inputs x 2 pipeline buffers
    max_rows = max(16, ((_INPUT_VMEM_BUDGET // bytes_per_row) // 16) * 16)

    if batch >= 32:
        # At least 2 grid steps so v7x can shard the batch axis across both
        # TensorCores; otherwise balance the tiles against the VMEM budget.
        target_tiles = max(2, pl.cdiv(batch, max_rows))
    else:
        target_tiles = 1

    tile = _round_up(pl.cdiv(batch, target_tiles), 16)
    tile = min(tile, max_rows)
    return max(16, tile)


def distill_kl(y_s, y_t, temperature, *, tile_b=None):
    """Pallas TPU implementation of DistillKL.forward(y_s, y_t)."""
    assert y_s.shape == y_t.shape and y_s.ndim == 2
    batch, num_classes = y_s.shape
    itemsize = jnp.dtype(y_s.dtype).itemsize

    if tile_b is None:
        tile_b = _pick_tile_b(batch, num_classes, itemsize)
    else:
        tile_b = max(16, (tile_b // 16) * 16)
        tile_b = min(tile_b, _round_up(batch, 16))

    num_tiles = pl.cdiv(batch, tile_b)
    mask_rows = (batch % tile_b) != 0  # static: only the ragged case pays for masks

    kernel = functools.partial(
        _distill_kl_kernel,
        inv_temperature=1.0 / float(temperature),
        batch=batch,
        tile_b=tile_b,
        mask_rows=mask_rows,
    )

    bytes_accessed = 2 * batch * num_classes * itemsize + num_tiles * 8 * 128 * 4
    cost = pl.CostEstimate(
        flops=12 * batch * num_classes,
        transcendentals=2 * batch * num_classes,
        bytes_accessed=bytes_accessed,
    )

    partials = pl.pallas_call(
        kernel,
        out_shape=jax.ShapeDtypeStruct((num_tiles * 8, 128), jnp.float32),
        grid=(num_tiles,),
        in_specs=[
            pl.BlockSpec((tile_b, num_classes), lambda i: (i, 0)),
            pl.BlockSpec((tile_b, num_classes), lambda i: (i, 0)),
        ],
        # One native (8, 128) f32 tile per grid step: unmasked, lane-dense store.
        out_specs=pl.BlockSpec((8, 128), lambda i: (i, 0)),
        compiler_params=pltpu.CompilerParams(
            dimension_semantics=("parallel",),
            vmem_limit_bytes=_VMEM_LIMIT_BYTES,
        ),
        cost_estimate=cost,
    )(y_s, y_t)

    T = jnp.float32(temperature)
    # One scalar per tile lives at row 8*i, column 0 of its slab.
    total = jnp.sum(partials[0::8, 0])
    return total * (T * T) / jnp.float32(batch)


def _distill_kl_ref(y_s, y_t, temperature):
    """Pure-JAX reference mirroring the PyTorch module."""
    T = temperature
    log_p_s = jax.nn.log_softmax(y_s.astype(jnp.float32) / T, axis=1)
    p_t = jax.nn.softmax(y_t.astype(jnp.float32) / T, axis=1)
    kl = p_t * (jnp.log(p_t) - log_p_s)
    return jnp.sum(kl) / y_s.shape[0] * (T ** 2)


def _check(loss, ref, tag):
    loss, ref = float(loss), float(ref)
    assert jnp.isfinite(loss), f"{tag}: loss is not finite"
    tol = 1e-4 + 1e-4 * abs(ref)
    assert abs(loss - ref) < tol, (tag, loss, ref)


if __name__ == "__main__":
    # DistillKL has no learnable parameters; only the temperature T.
    T = 4.0
    batch, num_classes = 40, 100  # CIFAR-100-style student/teacher logits

    key = jax.random.PRNGKey(0)
    k_s, k_t = jax.random.split(key)
    y_s = jax.random.normal(k_s, (batch, num_classes), dtype=jnp.float32)
    y_t = jax.random.normal(k_t, (batch, num_classes), dtype=jnp.float32)

    ref = jax.block_until_ready(_distill_kl_ref(y_s, y_t, T))

    # Auto-tiled path: tile_b=32 -> 2 grid steps, ragged (masked) last tile.
    loss = jax.block_until_ready(distill_kl(y_s, y_t, T))
    _check(loss, ref, "auto")

    # Explicit small tile: 3 grid steps, masked last tile (grid + mask path).
    loss_tiled = jax.block_until_ready(distill_kl(y_s, y_t, T, tile_b=16))
    _check(loss_tiled, ref, "tile_b=16")

    # Single oversize tile: masking of a fully-ragged block.
    loss_big = jax.block_until_ready(distill_kl(y_s, y_t, T, tile_b=64))
    _check(loss_big, ref, "tile_b=64")

    print("KERNEL_OK")
</pallas_src>

<mosaic_0001>
module attributes {stable_mosaic.version = 11 : i64} {
  func.func @_distill_kl_kernel(%arg0: i32, %arg1: memref<32x100xf32, #tpu.memory_space<vmem>>, %arg2: memref<32x100xf32, #tpu.memory_space<vmem>>, %arg3: memref<8x128xf32, #tpu.memory_space<vmem>>) attributes {dimension_semantics = [#tpu.dimension_semantics<parallel>], iteration_bounds = array<i64: 2>, scalar_prefetch = 0 : i64, scratch_operands = 0 : i64, tpu.core_type = #tpu.core_type<tc>, window_params = [{transform_indices = @transform_0, window_bounds = array<i64: 32, 100>}, {transform_indices = @transform_1, window_bounds = array<i64: 32, 100>}, {transform_indices = @transform_2, window_bounds = array<i64: 8, 128>}]} {
    %c0 = arith.constant 0 : index
    %c0_0 = arith.constant 0 : index
    %0 = vector.load %arg1[%c0, %c0_0] : memref<32x100xf32, #tpu.memory_space<vmem>>, vector<32x100xf32>
    %cst = arith.constant 2.500000e-01 : f32
    %1 = vector.broadcast %cst : f32 to vector<32x100xf32>
    %2 = arith.mulf %0, %1 : vector<32x100xf32>
    %c0_1 = arith.constant 0 : index
    %c0_2 = arith.constant 0 : index
    %3 = vector.load %arg2[%c0_1, %c0_2] : memref<32x100xf32, #tpu.memory_space<vmem>>, vector<32x100xf32>
    %cst_3 = arith.constant 2.500000e-01 : f32
    %4 = vector.broadcast %cst_3 : f32 to vector<32x100xf32>
    %5 = arith.mulf %3, %4 : vector<32x100xf32>
    %c32_i32 = arith.constant 32 : i32
    %6 = arith.muli %arg0, %c32_i32 : i32
    %7 = tpu.iota {dimensions = array<i32: 0>} : vector<32x1xi32>
    %8 = vector.broadcast %6 : i32 to vector<32x1xi32>
    %9 = arith.addi %8, %7 : vector<32x1xi32>
    %c40_i32 = arith.constant 40 : i32
    %10 = vector.broadcast %c40_i32 : i32 to vector<32x1xi32>
    %11 = arith.cmpi slt, %9, %10 : vector<32x1xi32>
    %cst_4 = arith.constant 0.000000e+00 : f32
    %12 = vector.shape_cast %11 : vector<32x1xi1> to vector<32x1xi1>
    %13 = vector.broadcast %12 : vector<32x1xi1> to vector<32x100xi1>
    %14 = vector.broadcast %cst_4 : f32 to vector<32x100xf32>
    %15 = arith.select %13, %2, %14 : vector<32x100xi1>, vector<32x100xf32>
    %cst_5 = arith.constant 0.000000e+00 : f32
    %16 = vector.shape_cast %11 : vector<32x1xi1> to vector<32x1xi1>
    %17 = vector.broadcast %16 : vector<32x1xi1> to vector<32x100xi1>
    %18 = vector.broadcast %cst_5 : f32 to vector<32x100xf32>
    %19 = arith.select %17, %5, %18 : vector<32x100xi1>, vector<32x100xf32>
    %cst_6 = arith.constant dense<0xFF800000> : vector<32xf32>
    %20 = vector.multi_reduction <maximumf>, %15, %cst_6 [1] : vector<32x100xf32> to vector<32xf32>
    %21 = vector.shape_cast %20 : vector<32xf32> to vector<32x1xf32>
    %22 = vector.broadcast %21 : vector<32x1xf32> to vector<32x100xf32>
    %23 = arith.subf %15, %22 : vector<32x100xf32>
    %24 = math.exp %23 : vector<32x100xf32>
    %cst_7 = arith.constant dense<0.000000e+00> : vector<32xf32>
    %25 = vector.multi_reduction <add>, %24, %cst_7 [1] : vector<32x100xf32> to vector<32xf32>
    %26 = vector.shape_cast %25 : vector<32xf32> to vector<32x1xf32>
    %27 = math.log %26 : vector<32x1xf32>
    %cst_8 = arith.constant dense<0xFF800000> : vector<32xf32>
    %28 = vector.multi_reduction <maximumf>, %19, %cst_8 [1] : vector<32x100xf32> to vector<32xf32>
    %29 = vector.shape_cast %28 : vector<32xf32> to vector<32x1xf32>
    %30 = vector.broadcast %29 : vector<32x1xf32> to vector<32x100xf32>
    %31 = arith.subf %19, %30 : vector<32x100xf32>
    %32 = math.exp %31 : vector<32x100xf32>
    %cst_9 = arith.constant dense<0.000000e+00> : vector<32xf32>
    %33 = vector.multi_reduction <add>, %32, %cst_9 [1] : vector<32x100xf32> to vector<32xf32>
    %34 = vector.shape_cast %33 : vector<32xf32> to vector<32x1xf32>
    %cst_10 = arith.constant 1.000000e+00 : f32
    %35 = vector.broadcast %cst_10 : f32 to vector<32x1xf32>
    %36 = arith.divf %35, %34 : vector<32x1xf32>
    %37 = vector.broadcast %36 : vector<32x1xf32> to vector<32x100xf32>
    %38 = arith.mulf %32, %37 : vector<32x100xf32>
    %39 = arith.subf %31, %23 : vector<32x100xf32>
    %40 = arith.mulf %38, %39 : vector<32x100xf32>
    %cst_11 = arith.constant dense<0.000000e+00> : vector<32xf32>
    %41 = vector.multi_reduction <add>, %40, %cst_11 [1] : vector<32x100xf32> to vector<32xf32>
    %42 = vector.shape_cast %41 : vector<32xf32> to vector<32x1xf32>
    %43 = math.log %34 : vector<32x1xf32>
    %44 = arith.subf %27, %43 : vector<32x1xf32>
    %45 = arith.addf %42, %44 : vector<32x1xf32>
    %46 = vector.shape_cast %45 : vector<32x1xf32> to vector<1x32x1xf32>
    %cst_12 = arith.constant dense<0.000000e+00> : vector<1xf32>
    %47 = vector.multi_reduction <add>, %46, %cst_12 [1, 2] : vector<1x32x1xf32> to vector<1xf32>
    %48 = vector.shape_cast %47 : vector<1xf32> to vector<1x1x1xf32>
    %49 = vector.extract %48[0, 0, 0] : f32 from vector<1x1x1xf32>
    %50 = vector.broadcast %49 : f32 to vector<8x128xf32>
    %c0_13 = arith.constant 0 : index
    %c0_14 = arith.constant 0 : index
    %51 = vector.load %arg3[%c0_13, %c0_14] : memref<8x128xf32, #tpu.memory_space<vmem>>, vector<8x128xf32>
    tpu.vector_store %arg3[%c0_13, %c0_14], %50 {strides = array<i32>} : memref<8x128xf32, #tpu.memory_space<vmem>>, vector<8x128xf32>,
    return
  }
  func.func @transform_0(%arg0: i32) -> (i32, i32) {
    %c0_i32 = arith.constant 0 : i32
    %c0_i32_0 = arith.constant 0 : i32
    return %arg0, %c0_i32 : i32, i32
  }
  func.func @transform_1(%arg0: i32) -> (i32, i32) {
    %c0_i32 = arith.constant 0 : i32
    %c0_i32_0 = arith.constant 0 : i32
    return %arg0, %c0_i32 : i32, i32
  }
  func.func @transform_2(%arg0: i32) -> (i32, i32) {
    %c0_i32 = arith.constant 0 : i32
    %c0_i32_0 = arith.constant 0 : i32
    return %arg0, %c0_i32 : i32, i32
  }
}

</mosaic_0001>

<llo_original>
// kernel: tpu_custom_call.1
$region0: #{tpu_custom_call.1}
  #allocation0 [shape = 'u32[]', space=smem, size = 0x4, offset = 0x4, fixed_abs, tag = 'smem constant byte address 0x4 - core index']
  #allocation1 [shape = 'u32[144,128]{1,0:T(1,128)}', space=vmem, size = 0x12000, scoped, tag = 'internal scratch']
  %s0 = inlined_call_operand.hbm [shape: f32[40,100], index: 0, kind: input, shape index: {}]
  %s1 = inlined_call_operand.hbm [shape: f32[40,100], index: 1, kind: input, shape index: {}]
  %s2 = inlined_call_operand.hbm [shape: f32[16,128], index: 2, kind: output, shape index: {}]
  %s3 = sld [smem:[#allocation0]]
  $region49: #{tpu_custom_call.1} parent=0
    _
  %s5 = ssub.s32 1, %s3
  %s6 = scalar_select 0, %s5, %s3
  $region1: #{tpu_custom_call.1} parent=0
    #allocation2 [shape = 'u8[32768]{0}', space=vmem, size = 0x8000, scoped, tag = 'input window, operand 0']
    #allocation3 [shape = 's32[2]{0}', space=sflag, size = 0x8, scoped, tag = 'scoped memory for tpu_custom_call.1']
    #allocation4 [shape = 's32[2]{0}', space=sflag, size = 0x8, scoped, tag = 'scoped memory for tpu_custom_call.1']
    #allocation5 [shape = 'u8[32768]{0}', space=vmem, size = 0x8000, scoped, tag = 'input window, operand 1']
    #allocation6 [shape = 's32[2]{0}', space=sflag, size = 0x8, scoped, tag = 'scoped memory for tpu_custom_call.1']
    #allocation7 [shape = 'u8[8192]{0}', space=vmem, size = 0x2000, scoped, tag = 'output window, operand 0']
    %7 = vsyncpa [#allocation3], 0
    %s8 = scalar_lea.sflag [#allocation3], 1
    %9 = vsyncpa %s8, 0
    %10 = vsyncpa [#allocation6], 0
    %s11 = scalar_lea.sflag [#allocation6], 1
    %12 = vsyncpa %s11, 0
    %13 = vsyncpa [#allocation4], 0
    %s14 = scalar_lea.sflag [#allocation4], 1
    %15 = vsyncpa %s14, 0
    loop: start=0, step=1, limit=4
    $region2: #{tpu_custom_call.1} parent=1 // loop_pre_header
      _
    $region3: #{tpu_custom_call.1} parent=1 // loop_header
      %s17 = sphi 0, %s21
      %p18 = scmp.ge.s32.totalorder %s17, 4
      %s27 = sphi 0, %s29
      %s30 = sphi 0, %s27
      %s31 = sphi 0, %s30
      %s47 = sphi 0, %s31
      %s53 = sphi 0, %s55
      %s56 = sphi 0, %s53
      %s57 = sphi 0, %s56
      %s73 = sphi 0, %s57
      %s79 = sphi 0, %s81
      %s82 = sphi 0, %s79
      %s83 = sphi 0, %s82
      %s99 = sphi 0, %s83
    $region4: #{tpu_custom_call.1} parent=1 // loop_header_branch
      %20 = sbr.rel (%p18) target = $region8
    $region5: #{tpu_custom_call.1} parent=1 // loop_body
      %s22 = ssub.s32 %s17, 1
      %s23 = ssub.s32 %s17, 2
      %s24 = sadd.s32 %s17, 1
      %s25 = ssub.s32 %s17, %s24
      %p26 = scmp.eq.s32.totalorder %s25, 0
      %s28 = sadd.s32 %s27, 1
      %s29 = scalar_select %p26, %s27, %s28
      %p32 = pneg %p26
      %p33 = scmp.eq.s32.totalorder %s17, 1
      %p34 = por %p32, %p33
      %p35 = scmp.ne.s32.totalorder %s27, %s30
      %p36 = scmp.eq.s32.totalorder %s17, 0
      %p37 = por %p35, %p36
      %p38 = scmp.ne.s32.totalorder %s27, %s30
      %p39 = scmp.eq.s32.totalorder %s22, 1
      %p40 = por %p38, %p39
      %p41 = scmp.ne.s32.totalorder %s30, %s31
      %p42 = scmp.eq.s32.totalorder %s22, 0
      %p43 = por %p41, %p42
      %p44 = scmp.ne.s32.totalorder %s30, %s31
      %p45 = scmp.eq.s32.totalorder %s23, 1
      %p46 = por %p44, %p45
      %p48 = scmp.ne.s32.totalorder %s31, %s47
      %p49 = scmp.eq.s32.totalorder %s23, 0
      %p50 = por %p48, %p49
      %s51 = ssub.s32 %s17, %s24
      %p52 = scmp.eq.s32.totalorder %s51, 0
      %s54 = sadd.s32 %s53, 1
      %s55 = scalar_select %p52, %s53, %s54
      %p58 = pneg %p52
      %p59 = scmp.eq.s32.totalorder %s17, 1
      %p60 = por %p58, %p59
      %p61 = scmp.ne.s32.totalorder %s53, %s56
      %p62 = scmp.eq.s32.totalorder %s17, 0
      %p63 = por %p61, %p62
      %p64 = scmp.ne.s32.totalorder %s53, %s56
      %p65 = scmp.eq.s32.totalorder %s22, 1
      %p66 = por %p64, %p65
      %p67 = scmp.ne.s32.totalorder %s56, %s57
      %p68 = scmp.eq.s32.totalorder %s22, 0
      %p69 = por %p67, %p68
      %p70 = scmp.ne.s32.totalorder %s56, %s57
      %p71 = scmp.eq.s32.totalorder %s23, 1
      %p72 = por %p70, %p71
      %p74 = scmp.ne.s32.totalorder %s57, %s73
      %p75 = scmp.eq.s32.totalorder %s23, 0
      %p76 = por %p74, %p75
      %s77 = ssub.s32 %s17, %s24
      %p78 = scmp.eq.s32.totalorder %s77, 0
      %s80 = sadd.s32 %s79, 1
      %s81 = scalar_select %p78, %s79, %s80
      %p84 = pneg %p78
      %p85 = scmp.eq.s32.totalorder %s17, 1
      %p86 = por %p84, %p85
      %p87 = scmp.ne.s32.totalorder %s79, %s82
      %p88 = scmp.eq.s32.totalorder %s17, 0
      %p89 = por %p87, %p88
      %p90 = scmp.ne.s32.totalorder %s79, %s82
      %p91 = scmp.eq.s32.totalorder %s22, 1
      %p92 = por %p90, %p91
      %p93 = scmp.ne.s32.totalorder %s82, %s83
      %p94 = scmp.eq.s32.totalorder %s22, 0
      %p95 = por %p93, %p94
      %p96 = scmp.ne.s32.totalorder %s82, %s83
      %p97 = scmp.eq.s32.totalorder %s23, 1
      %p98 = por %p96, %p97
      %p100 = scmp.ne.s32.totalorder %s83, %s99
      %p101 = scmp.eq.s32.totalorder %s23, 0
      %p102 = por %p100, %p101
      %p103 = scmp.le.s32.totalorder 1, %s17
      %p104 = scmp.lt.s32.totalorder %s17, 3
      %p105 = pnand %p103, %p104
      %p106 = pneg %p105
      // Predicated region
      $region9: #{tpu_custom_call.1} parent=5 // pred_check
        _
      $region10: #{tpu_custom_call.1} parent=5 // pred_check_branch
        %108 = sbr.rel (%p105) target = $region12
      $region11: #{tpu_custom_call.1} parent=5 // pred_region
        %s109 = ssub.s32 %s17, 1
      $region12: #{tpu_custom_call.1} parent=5 // pred_fallthru
        _
      %p110 = scmp.lt.s32.totalorder %s17, 2
      // Predicated region
      $region13: #{tpu_custom_call.1} parent=5 // pred_check
        %p111 = pneg %p110
      $region14: #{tpu_custom_call.1} parent=5 // pred_check_branch
        %113 = sbr.rel (%p111) target = $region16
      $region15: #{tpu_custom_call.1} parent=5 // pred_region
        // Predicated region
        $region17: #{tpu_custom_call.1} parent=15 // pred_check
          %p114 = pneg %p37
        $region18: #{tpu_custom_call.1} parent=15 // pred_check_branch
          %116 = sbr.rel (%p114) target = $region20
        $region19: #{tpu_custom_call.1} parent=15 // pred_region
          %s117 = sand.u32 %s27, 1
          %s118 = scalar_lea.sflag [#allocation3], %s117
          %s119 = sand.u32 %s27, 1
          %s120 = smul.addr %s119, 32
          %s121 = scalar_lea.vmem [#allocation2], %s120
          %s122 = smul.u32 4, %s17
          %s123 = ssub.s32 5, %s122
          %p124 = scmp.lt.s32.totalorder %s123, 4
          %s125 = scalar_select %p124, %s123, 4
          %s126 = smul.u32 128, %s125
          %s128 = ssub.s32 512, %s126
          %129 = vsyncadd %s118, %s128
          %p130 = scmp.ne.s32.totalorder 0, %s126
          %s131 = smul.addr %s122, 128
          %s132 = scalar_lea.hbm %s0, %s131
          %s133 = smul.u32 8, %s125
          %s134 = sshll.u32 %s121, 4
          %s135 = int_to_ptr.vmem [resolvable:$true] %s134
          %s136 = sshll.u32 %s133, 4
          %140 = dma.hbm_to_vmem [thread:$0]  (%p130), %s132, %s136, %s135, %s118, 128, 128, 8
        $region20: #{tpu_custom_call.1} parent=15 // pred_fallthru
          _
        // Predicated region
        $region21: #{tpu_custom_call.1} parent=15 // pred_check
          %p141 = pneg %p63
        $region22: #{tpu_custom_call.1} parent=15 // pred_check_branch
          %143 = sbr.rel (%p141) target = $region24
        $region23: #{tpu_custom_call.1} parent=15 // pred_region
          %s144 = sand.u32 %s53, 1
          %s145 = scalar_lea.sflag [#allocation6], %s144
          %s146 = sand.u32 %s53, 1
          %s147 = smul.addr %s146, 32
          %s148 = scalar_lea.vmem [#allocation5], %s147
          %s149 = smul.u32 4, %s17
          %s150 = ssub.s32 5, %s149
          %p151 = scmp.lt.s32.totalorder %s150, 4
          %s152 = scalar_select %p151, %s150, 4
          %s153 = smul.u32 128, %s152
          %s155 = ssub.s32 512, %s153
          %156 = vsyncadd %s145, %s155
          %p157 = scmp.ne.s32.totalorder 0, %s153
          %s158 = smul.addr %s149, 128
          %s159 = scalar_lea.hbm %s1, %s158
          %s160 = smul.u32 8, %s152
          %s161 = sshll.u32 %s148, 4
          %s162 = int_to_ptr.vmem [resolvable:$true] %s161
          %s163 = sshll.u32 %s160, 4
          %167 = dma.hbm_to_vmem [thread:$0]  (%p157), %s159, %s163, %s162, %s145, 128, 128, 8
        $region24: #{tpu_custom_call.1} parent=15 // pred_fallthru
          _
      $region16: #{tpu_custom_call.1} parent=5 // pred_fallthru
        _
      %p168 = scmp.le.s32.totalorder 1, %s17
      %p169 = scmp.lt.s32.totalorder %s17, 3
      %p170 = pnand %p168, %p169
      %p171 = pneg %p170
      // Predicated region
      $region25: #{tpu_custom_call.1} parent=5 // pred_check
        _
      $region26: #{tpu_custom_call.1} parent=5 // pred_check_branch
        %173 = sbr.rel (%p170) target = $region28
      $region27: #{tpu_custom_call.1} parent=5 // pred_region
        %s174 = ssub.s32 %s17, 1
        %s175 = sand.u32 %s30, 1
        %s176 = scalar_lea.sflag [#allocation3], %s175
        %s177 = sand.u32 %s30, 1
        %s178 = smul.addr %s177, 32
        %s179 = scalar_lea.vmem [#allocation2], %s178
        // Predicated region
        $region29: #{tpu_custom_call.1} parent=27 // pred_check
          %p180 = pneg %p43
        $region30: #{tpu_custom_call.1} parent=27 // pred_check_branch
          %182 = sbr.rel (%p180) target = $region32
        $region31: #{tpu_custom_call.1} parent=27 // pred_region
          %183 = dma.done %s176, 512
        $region32: #{tpu_custom_call.1} parent=27 // pred_fallthru
          _
        %s184 = sand.u32 %s56, 1
        %s185 = scalar_lea.sflag [#allocation6], %s184
        %s186 = sand.u32 %s56, 1
        %s187 = smul.addr %s186, 32
        %s188 = scalar_lea.vmem [#allocation5], %s187
        // Predicated region
        $region33: #{tpu_custom_call.1} parent=27 // pred_check
          %p189 = pneg %p69
        $region34: #{tpu_custom_call.1} parent=27 // pred_check_branch
          %191 = sbr.rel (%p189) target = $region36
        $region35: #{tpu_custom_call.1} parent=27 // pred_region
          %192 = dma.done %s185, 512
        $region36: #{tpu_custom_call.1} parent=27 // pred_fallthru
          _
        %s193 = sand.u32 %s30, 1
        %s194 = scalar_lea.sflag [#allocation3], %s193
        %s195 = sand.u32 %s30, 1
        %s196 = smul.addr %s195, 32
        %s197 = scalar_lea.vmem [#allocation2], %s196
        %p198 = pneg %p43
        %p199 = pneg %p40
        %s200 = sand.u32 %s56, 1
        %s201 = scalar_lea.sflag [#allocation6], %s200
        %s202 = sand.u32 %s56, 1
        %s203 = smul.addr %s202, 32
        %s204 = scalar_lea.vmem [#allocation5], %s203
        %p205 = pneg %p69
        %p206 = pneg %p66
        %p207 = pneg %p95
        %p208 = pneg %p92
        %s209 = sand.u32 %s82, 1
        %s210 = scalar_lea.sflag [#allocation4], %s209
        %s211 = sand.u32 %s82, 1
        %s212 = smul.addr %s211, 8
        %s213 = scalar_lea.vmem [#allocation7], %s212
        %s214 = smul.u32 4, %s22
        %s215 = ssub.s32 5, %s214
        %p216 = scmp.lt.s32.totalorder %s215, 4
        %s217 = scalar_select %p216, %s215, 4
        %s218 = smul.u32 128, %s217
        %s219 = smul.u32 4, %s22
        %s220 = ssub.s32 5, %s219
        %p221 = scmp.lt.s32.totalorder %s220, 4
        %s222 = scalar_select %p221, %s220, 4
        %s223 = smul.u32 128, %s222
        %v224 = vld [vmem:[%s179] sm:$0xff]
        %v225 = vld [vmem:[%s179 + $0x8] sm:$0xff]
        %v226 = vld [vmem:[%s179 + $0x10] sm:$0xff]
        %v227 = vld [vmem:[%s179 + $0x18] sm:$0xff]
        %v228 = vmul.f32 %v224, 0.25
        %v229 = vmul.f32 %v225, 0.25
        %v230 = vmul.f32 %v226, 0.25
        %v231 = vmul.f32 %v227, 0.25
        %v232 = vld [vmem:[%s188] sm:$0xff]
        %v233 = vld [vmem:[%s188 + $0x8] sm:$0xff]
        %v234 = vld [vmem:[%s188 + $0x10] sm:$0xff]
        %v235 = vld [vmem:[%s188 + $0x18] sm:$0xff]
        %v236 = vmul.f32 %v232, 0.25
        %v237 = vmul.f32 %v233, 0.25
        %v238 = vmul.f32 %v234, 0.25
        %v239 = vmul.f32 %v235, 0.25
        %s240 = smul.u32 %s22, 32
        %v241 = vlaneseq
        %v242 = vshrl.u32 %v241, 7
        %v243 = vadd.s32 %v242, 8
        %v244 = vadd.s32 %v242, 16
        %v245 = vadd.s32 %v242, 24
        %v246 = vstv %s240
        %v247 = vadd.s32 %v246, %v242
        %v248 = vadd.s32 %v246, %v243
        %v249 = vadd.s32 %v246, %v244
        %v250 = vadd.s32 %v246, %v245
        %vm251 = vcmp.lt.s32.totalorder %v247, 40
        %vm252 = vcmp.lt.s32.totalorder %v248, 40
        %vm253 = vcmp.lt.s32.totalorder %v249, 40
        %vm254 = vcmp.lt.s32.totalorder %v250, 40
        %v255 = vsel %vm251, 1, 0
        %v256 = vsel %vm252, 1, 0
        %v257 = vsel %vm253, 1, 0
        %v258 = vsel %vm254, 1, 0
        %vm259 = vcmp.eq.s32.totalorder %v255, 1
        %vm260 = vcmp.eq.s32.totalorder %v256, 1
        %vm261 = vcmp.eq.s32.totalorder %v257, 1
        %vm262 = vcmp.eq.s32.totalorder %v258, 1
        %v263 = vsel %vm259, %v228, 0.0
        %v264 = vsel %vm260, %v229, 0.0
        %v265 = vsel %vm261, %v230, 0.0
        %v266 = vsel %vm262, %v231, 0.0
        %v267 = vsel %vm259, %v236, 0.0
        %v268 = vsel %vm260, %v237, 0.0
        %v269 = vsel %vm261, %v238, 0.0
        %v270 = vsel %vm262, %v239, 0.0
        %vm271 = vcmask 818176
        %v272 = vsel %vm271, %v263, -inf
        %273 = vmax.xlane.f32.xlu0 %v272
        %v274 = vpop.xlane.xlu0 %273
        %v275 = vsel %vm271, %v264, -inf
        %276 = vmax.xlane.f32.xlu0 %v275
        %v277 = vpop.xlane.xlu0 %276
        %v278 = vsel %vm271, %v265, -inf
        %279 = vmax.xlane.f32.xlu0 %v278
        %v280 = vpop.xlane.xlu0 %279
        %v281 = vsel %vm271, %v266, -inf
        %282 = vmax.xlane.f32.xlu0 %v281
        %v283 = vpop.xlane.xlu0 %282
        %v284 = vsub.f32 %v263, %v274
        %v285 = vsub.f32 %v264, %v277
        %v286 = vsub.f32 %v265, %v280
        %v287 = vsub.f32 %v266, %v283
        %v288 = vmul.f32 %v284, 1.442695
        %v289 = vpow.pop %v288
        %v290 = vmul.f32 %v285, 1.442695
        %v291 = vpow.pop %v290
        %v292 = vmul.f32 %v286, 1.442695
        %v293 = vpow.pop %v292
        %v294 = vmul.f32 %v287, 1.442695
        %v295 = vpow.pop %v294
        %v296 = vsel %vm271, %v289, 0.0
        %297 = vadd.xlane.f32.xlu0 %v296
        %v298 = vpop.xlane.xlu0 %297
        %v299 = vsel %vm271, %v291, 0.0
        %300 = vadd.xlane.f32.xlu0 %v299
        %v301 = vpop.xlane.xlu0 %300
        %v302 = vsel %vm271, %v293, 0.0
        %303 = vadd.xlane.f32.xlu0 %v302
        %v304 = vpop.xlane.xlu0 %303
        %v305 = vsel %vm271, %v295, 0.0
        %306 = vadd.xlane.f32.xlu0 %v305
        %v307 = vpop.xlane.xlu0 %306
        %v308 = vlog2.pop %v298
        %v309 = vmul.f32 %v308, 0.6931472
        %v310 = vlog2.pop %v301
        %v311 = vmul.f32 %v310, 0.6931472
        %v312 = vlog2.pop %v304
        %v313 = vmul.f32 %v312, 0.6931472
        %v314 = vlog2.pop %v307
        %v315 = vmul.f32 %v314, 0.6931472
        %v316 = vsel %vm271, %v267, -inf
        %317 = vmax.xlane.f32.xlu0 %v316
        %v318 = vpop.xlane.xlu0 %317
        %v319 = vsel %vm271, %v268, -inf
        %320 = vmax.xlane.f32.xlu0 %v319
        %v321 = vpop.xlane.xlu0 %320
        %v322 = vsel %vm271, %v269, -inf
        %323 = vmax.xlane.f32.xlu0 %v322
        %v324 = vpop.xlane.xlu0 %323
        %v325 = vsel %vm271, %v270, -inf
        %326 = vmax.xlane.f32.xlu0 %v325
        %v327 = vpop.xlane.xlu0 %326
        %v328 = vsub.f32 %v267, %v318
        %v329 = vsub.f32 %v268, %v321
        %v330 = vsub.f32 %v269, %v324
        %v331 = vsub.f32 %v270, %v327
        %v332 = vmul.f32 %v328, 1.442695
        %v333 = vpow.pop %v332
        %v334 = vmul.f32 %v329, 1.442695
        %v335 = vpow.pop %v334
        %v336 = vmul.f32 %v330, 1.442695
        %v337 = vpow.pop %v336
        %v338 = vmul.f32 %v331, 1.442695
        %v339 = vpow.pop %v338
        %v340 = vsel %vm271, %v333, 0.0
        %341 = vadd.xlane.f32.xlu0 %v340
        %v342 = vpop.xlane.xlu0 %341
        %v343 = vsel %vm271, %v335, 0.0
        %344 = vadd.xlane.f32.xlu0 %v343
        %v345 = vpop.xlane.xlu0 %344
        %v346 = vsel %vm271, %v337, 0.0
        %347 = vadd.xlane.f32.xlu0 %v346
        %v348 = vpop.xlane.xlu0 %347
        %v349 = vsel %vm271, %v339, 0.0
        %350 = vadd.xlane.f32.xlu0 %v349
        %v351 = vpop.xlane.xlu0 %350
        %v352 = vrcp.pop %v342
        %v353 = vmul.f32 1.0, %v352
        %v354 = vrcp.pop %v345
        %v355 = vmul.f32 1.0, %v354
        %v356 = vrcp.pop %v348
        %v357 = vmul.f32 1.0, %v356
        %v358 = vrcp.pop %v351
        %v359 = vmul.f32 1.0, %v358
        %v360 = vmul.f32 %v333, %v353
        %v361 = vmul.f32 %v335, %v355
        %v362 = vmul.f32 %v337, %v357
        %v363 = vmul.f32 %v339, %v359
        %v364 = vsub.f32 %v328, %v284
        %v365 = vsub.f32 %v329, %v285
        %v366 = vsub.f32 %v330, %v286
        %v367 = vsub.f32 %v331, %v287
        %v368 = vmul.f32 %v360, %v364
        %v369 = vmul.f32 %v361, %v365
        %v370 = vmul.f32 %v362, %v366
        %v371 = vmul.f32 %v363, %v367
        %v372 = vsel %vm271, %v368, 0.0
        %373 = vadd.xlane.f32.xlu0 %v372
        %v374 = vpop.xlane.xlu0 %373
        %v375 = vsel %vm271, %v369, 0.0
        %376 = vadd.xlane.f32.xlu0 %v375
        %v377 = vpop.xlane.xlu0 %376
        %v378 = vsel %vm271, %v370, 0.0
        %379 = vadd.xlane.f32.xlu0 %v378
        %v380 = vpop.xlane.xlu0 %379
        %v381 = vsel %vm271, %v371, 0.0
        %382 = vadd.xlane.f32.xlu0 %v381
        %v383 = vpop.xlane.xlu0 %382
        %v384 = vlog2.pop %v342
        %v385 = vmul.f32 %v384, 0.6931472
        %v386 = vlog2.pop %v345
        %v387 = vmul.f32 %v386, 0.6931472
        %v388 = vlog2.pop %v348
        %v389 = vmul.f32 %v388, 0.6931472
        %v390 = vlog2.pop %v351
        %v391 = vmul.f32 %v390, 0.6931472
        %v392 = vsub.f32 %v309, %v385
        %v393 = vsub.f32 %v311, %v387
        %v394 = vsub.f32 %v313, %v389
        %v395 = vsub.f32 %v315, %v391
        %v396 = vadd.f32 %v374, %v392
        %v397 = vadd.f32 %v377, %v393
        %v398 = vadd.f32 %v380, %v394
        %v399 = vadd.f32 %v383, %v395
        %vm400 = vcmask 7168
        %v401 = vsel %vm400, %v396, 0.0
        %v402 = vsel %vm400, %v397, 0.0
        %v403 = vadd.f32 %v401, %v402
        %v404 = vsel %vm400, %v398, 0.0
        %v405 = vadd.f32 %v403, %v404
        %v406 = vsel %vm400, %v399, 0.0
        %v407 = vadd.f32 %v405, %v406
        %408 = vadd.xlane.f32.xlu0 %v407
        %v409 = vpop.xlane.xlu0 %408
        %v410 = vrot.slane %v409, 4
        %v411 = vadd.f32 %v409, %v410
        %v412 = vrot.slane %v411, 2
        %v413 = vadd.f32 %v411, %v412
        %v414 = vrot.slane %v413, 1
        %v415 = vadd.f32 %v413, %v414
        %s416 = vtos %v415
        %v417 = vstv %s416
        %418 = vst [vmem:[%s213] sm:$0xff] %v417
        %s419 = sand.u32 %s82, 1
        %s420 = scalar_lea.sflag [#allocation4], %s419
        %s421 = sand.u32 %s82, 1
        %s422 = smul.addr %s421, 8
        %s423 = scalar_lea.vmem [#allocation7], %s422
        // Predicated region
        $region37: #{tpu_custom_call.1} parent=27 // pred_check
          %p424 = pneg %p92
        $region38: #{tpu_custom_call.1} parent=27 // pred_check_branch
          %426 = sbr.rel (%p424) target = $region40
        $region39: #{tpu_custom_call.1} parent=27 // pred_region
          %s428 = ssub.s32 128, 128
          %429 = vsyncadd %s420, %s428
          %s430 = smul.addr %s22, 128
          %s431 = scalar_lea.hbm %s2, %s430
          %s433 = sshll.u32 %s423, 4
          %s434 = int_to_ptr.vmem [resolvable:$true] %s433
          %436 = dma.vmem_to_hbm [thread:$0]  %s434, 128, %s431, %s420
        $region40: #{tpu_custom_call.1} parent=27 // pred_fallthru
          _
      $region28: #{tpu_custom_call.1} parent=5 // pred_fallthru
        _
      %p437 = scmp.le.s32.totalorder 2, %s17
      // Predicated region
      $region41: #{tpu_custom_call.1} parent=5 // pred_check
        %p438 = pneg %p437
      $region42: #{tpu_custom_call.1} parent=5 // pred_check_branch
        %440 = sbr.rel (%p438) target = $region44
      $region43: #{tpu_custom_call.1} parent=5 // pred_region
        %s441 = ssub.s32 %s17, 2
        // Predicated region
        $region45: #{tpu_custom_call.1} parent=43 // pred_check
          %p442 = pneg %p98
        $region46: #{tpu_custom_call.1} parent=43 // pred_check_branch
          %444 = sbr.rel (%p442) target = $region48
        $region47: #{tpu_custom_call.1} parent=43 // pred_region
          %s445 = sand.u32 %s83, 1
          %s446 = scalar_lea.sflag [#allocation4], %s445
          %s447 = sand.u32 %s83, 1
          %s448 = smul.addr %s447, 8
          %s449 = scalar_lea.vmem [#allocation7], %s448
          %450 = dma.done %s446, 128
        $region48: #{tpu_custom_call.1} parent=43 // pred_fallthru
          _
      $region44: #{tpu_custom_call.1} parent=5 // pred_fallthru
        _
    $region6: #{tpu_custom_call.1} parent=1 // loop_footer
      %s21 = sadd.s32 1, %s17
    $region7: #{tpu_custom_call.1} parent=1 // loop_footer_branch
      %16 = sbr.rel target = $region3
    $region8: #{tpu_custom_call.1} parent=1 // loop_exit
      _
    %451 = vsyncpa [#allocation3], 1
    %s452 = scalar_lea.sflag [#allocation3], 1
    %453 = vsyncpa %s452, 1
    %454 = vsyncpa [#allocation6], 1
    %s455 = scalar_lea.sflag [#allocation6], 1
    %456 = vsyncpa %s455, 1
    %457 = vsyncpa [#allocation4], 1
    %s458 = scalar_lea.sflag [#allocation4], 1
    %459 = vsyncpa %s458, 1

</llo_original>
